<compile_context>
chip_gen: v7x
topology: tpu7x:2x2x1
jax: 0.10.0
libtpu: 0.0.40
codegen_flags: <defaults>
</compile_context>

<pallas_src>
import functools

import jax
import jax.numpy as jnp
from jax.experimental import pallas as pl
from jax.experimental.pallas import tpu as pltpu


def _round_up(x, m):
    return ((x + m - 1) // m) * m


def _pick_tile_n(n, in_dim, out_pad, dtype_bytes=4, vmem_budget=24 << 20):
    """Largest row tile (multiple of 8) whose double-buffered working set fits VMEM."""
    resident = (in_dim * out_pad + out_pad) * dtype_bytes          # weight + bias
    avail = max(vmem_budget - resident, 1 << 20)
    per_row = 2 * (in_dim + out_pad) * dtype_bytes                 # 2x-buffered in + out
    tn = min(avail // per_row, 2048, _round_up(max(n, 1), 8))
    tn = max(8, (tn // 8) * 8)
    return int(tn)


def _linear_kernel(x_ref, wt_ref, b_ref, o_ref):
    # out = x @ W^T + b, with W^T pre-materialized as (in_dim, out_pad): plain MXU matmul.
    acc = jnp.dot(x_ref[...], wt_ref[...], preferred_element_type=jnp.float32)
    o_ref[...] = (acc + b_ref[...]).astype(o_ref.dtype)


@functools.partial(jax.jit, static_argnames=("in_dim",))
def net_forward(x, weight, bias, *, in_dim):
    """Pallas equivalent of Net.forward: x.view(-1, in_dim) -> fc(x)."""
    x2d = x.reshape(-1, in_dim)                      # the .view(-1, in_dim)
    n = x2d.shape[0]
    out_dim = weight.shape[0]
    dtype = x2d.dtype

    # Lane-dense output: pad out_dim up to a multiple of 128; transpose weight once.
    out_pad = _round_up(max(out_dim, 1), 128)
    wt_pad = (
        jnp.zeros((in_dim, out_pad), dtype=weight.dtype).at[:, :out_dim].set(weight.T)
    )
    b_pad = jnp.zeros((1, out_pad), dtype=bias.dtype).at[0, :out_dim].set(bias)

    # Row tiling: tile is a multiple of 8 sublanes, sized to fit the VMEM budget;
    # pad N up to a tile multiple so every block is full (last block never ragged).
    tn = _pick_tile_n(n, in_dim, out_pad)
    n_pad = _round_up(max(n, 1), tn)
    if n_pad != n:
        x2d = jnp.pad(x2d, ((0, n_pad - n), (0, 0)))
    grid = (n_pad // tn,)

    cost = pl.CostEstimate(
        flops=2 * n_pad * in_dim * out_pad,
        transcendentals=0,
        bytes_accessed=(n_pad * in_dim + in_dim * out_pad + out_pad
                        + n_pad * out_pad) * 4,
    )

    out_padded = pl.pallas_call(
        _linear_kernel,
        out_shape=jax.ShapeDtypeStruct((n_pad, out_pad), dtype),
        grid_spec=pltpu.PrefetchScalarGridSpec(
            num_scalar_prefetch=0,
            grid=grid,
            in_specs=[
                pl.BlockSpec((tn, in_dim), lambda i: (i, 0)),       # x tile (pipelined)
                pl.BlockSpec((in_dim, out_pad), lambda i: (0, 0)),  # W^T (resident)
                pl.BlockSpec((1, out_pad), lambda i: (0, 0)),       # bias (resident)
            ],
            out_specs=pl.BlockSpec((tn, out_pad), lambda i: (i, 0)),
        ),
        compiler_params=pltpu.CompilerParams(
            dimension_semantics=("parallel",),   # independent row tiles; megacore on v7x
            vmem_limit_bytes=32 << 20,           # safe on v7x's 64 MiB physical VMEM
        ),
        cost_estimate=cost,
    )(x2d, wt_pad, b_pad)

    # Strip row padding and lane padding.
    return out_padded[:n, :out_dim]


if __name__ == "__main__":
    # Small shapes consistent with the module: Net(in_dim=32, out_dim=2).
    in_dim = 32
    out_dim = 2

    key = jax.random.PRNGKey(0)
    kx, kw = jax.random.split(key)

    # Input: any leading shape, flattened to (-1, in_dim) inside forward.
    x = jax.random.normal(kx, (2, 4, 8), dtype=jnp.float32)  # 2*4*8 = 64 -> (2, 32)

    # Deterministic parameter init mirroring weight_init(mean=0, std=0.02):
    # weight ~ N(0, 0.02), bias = 0.
    weight = 0.02 * jax.random.normal(kw, (out_dim, in_dim), dtype=jnp.float32)
    bias = jnp.zeros((out_dim,), dtype=jnp.float32)

    out = net_forward(x, weight, bias, in_dim=in_dim)
    out = jax.block_until_ready(out)

    # Reference check against plain JAX.
    ref = x.reshape(-1, in_dim) @ weight.T + bias
    assert out.shape == (x.size // in_dim, out_dim)
    assert jnp.allclose(out, ref, atol=1e-5), "mismatch vs reference"

    print("KERNEL_OK")
</pallas_src>

<mosaic_0001>
module attributes {stable_mosaic.version = 11 : i64} {
  func.func @_linear_kernel(%arg0: i32, %arg1: memref<8x32xf32, #tpu.memory_space<vmem>>, %arg2: memref<32x128xf32, #tpu.memory_space<vmem>>, %arg3: memref<1x128xf32, #tpu.memory_space<vmem>>, %arg4: memref<8x128xf32, #tpu.memory_space<vmem>>) attributes {dimension_semantics = [#tpu.dimension_semantics<parallel>], iteration_bounds = array<i64: 1>, scalar_prefetch = 0 : i64, scratch_operands = 0 : i64, tpu.core_type = #tpu.core_type<tc>, window_params = [{transform_indices = @transform_0, window_bounds = array<i64: 8, 32>}, {pipeline_mode = #tpu.pipeline_mode<synchronous>, transform_indices = @transform_1, window_bounds = array<i64: 32, 128>}, {pipeline_mode = #tpu.pipeline_mode<synchronous>, transform_indices = @transform_2, window_bounds = array<i64: 1, 128>}, {transform_indices = @transform_3, window_bounds = array<i64: 8, 128>}]} {
    %c0 = arith.constant 0 : index
    %c0_0 = arith.constant 0 : index
    %0 = vector.load %arg1[%c0, %c0_0] : memref<8x32xf32, #tpu.memory_space<vmem>>, vector<8x32xf32>
    %c0_1 = arith.constant 0 : index
    %c0_2 = arith.constant 0 : index
    %1 = vector.load %arg2[%c0_1, %c0_2] : memref<32x128xf32, #tpu.memory_space<vmem>>, vector<32x128xf32>
    %cst = arith.constant dense<0.000000e+00> : vector<8x128xf32>
    %2 = tpu.matmul %0, %1, %cst {dimension_numbers = #tpu.dot_dimension_numbers<[1], [0], [0], [1], [0, 0, 1, 1], [], []>} : vector<8x32xf32>, vector<32x128xf32>, vector<8x128xf32> -> vector<8x128xf32>
    %c0_3 = arith.constant 0 : index
    %c0_4 = arith.constant 0 : index
    %3 = vector.load %arg3[%c0_3, %c0_4] : memref<1x128xf32, #tpu.memory_space<vmem>>, vector<1x128xf32>
    %4 = vector.broadcast %3 : vector<1x128xf32> to vector<8x128xf32>
    %5 = arith.addf %2, %4 : vector<8x128xf32>
    %c0_5 = arith.constant 0 : index
    %c0_6 = arith.constant 0 : index
    %6 = vector.load %arg4[%c0_5, %c0_6] : memref<8x128xf32, #tpu.memory_space<vmem>>, vector<8x128xf32>
    tpu.vector_store %arg4[%c0_5, %c0_6], %5 {strides = array<i32>} : memref<8x128xf32, #tpu.memory_space<vmem>>, vector<8x128xf32>,
    return
  }
  func.func @transform_0(%arg0: i32) -> (i32, i32) {
    %c0_i32 = arith.constant 0 : i32
    %c0_i32_0 = arith.constant 0 : i32
    return %arg0, %c0_i32 : i32, i32
  }
  func.func @transform_1(%arg0: i32) -> (i32, i32) {
    %c0_i32 = arith.constant 0 : i32
    %c0_i32_0 = arith.constant 0 : i32
    %c0_i32_1 = arith.constant 0 : i32
    return %c0_i32, %c0_i32_0 : i32, i32
  }
  func.func @transform_2(%arg0: i32) -> (i32, i32) {
    %c0_i32 = arith.constant 0 : i32
    %c0_i32_0 = arith.constant 0 : i32
    %c0_i32_1 = arith.constant 0 : i32
    return %c0_i32, %c0_i32_0 : i32, i32
  }
  func.func @transform_3(%arg0: i32) -> (i32, i32) {
    %c0_i32 = arith.constant 0 : i32
    %c0_i32_0 = arith.constant 0 : i32
    return %arg0, %c0_i32 : i32, i32
  }
}

</mosaic_0001>

<llo_original>
// kernel: net_forward.1
$region0: #{net_forward.1}
  #allocation0 [shape = 'u32[]', space=smem, size = 0x4, offset = 0x4, fixed_abs, tag = 'smem constant byte address 0x4 - core index']
  #allocation1 [shape = 'u32[144,128]{1,0:T(1,128)}', space=vmem, size = 0x12000, scoped, tag = 'internal scratch']
  %s0 = inlined_call_operand.vmem [shape: f32[8,32], index: 0, kind: input, shape index: {}]
  %s1 = inlined_call_operand.vmem [shape: f32[32,128], index: 1, kind: input, shape index: {}]
  %s2 = inlined_call_operand.vmem [shape: f32[1,128], index: 2, kind: input, shape index: {}]
  %s3 = inlined_call_operand.vmem [shape: f32[8,128], index: 3, kind: output, shape index: {}]
  %s4 = sld [smem:[#allocation0]]
  $region22: #{net_forward.1} parent=0
    _
  %s6 = ssub.s32 1, %s4
  %s7 = scalar_select 0, %s6, %s4
  // Predicated region
  $region2: #{net_forward.1} parent=0 // pred_check
    _
  $region3: #{net_forward.1} parent=0 // pred_check_branch
    %9 = sbr.rel (0) target = $region5
  $region4: #{net_forward.1} parent=0 // pred_region
    _
  $region5: #{net_forward.1} parent=0 // pred_fallthru
    _
  // Predicated region
  $region6: #{net_forward.1} parent=0 // pred_check
    _
  $region7: #{net_forward.1} parent=0 // pred_check_branch
    %11 = sbr.rel (0) target = $region9
  $region8: #{net_forward.1} parent=0 // pred_region
    _
  $region9: #{net_forward.1} parent=0 // pred_fallthru
    _
  // Predicated region
  $region10: #{net_forward.1} parent=0 // pred_check
    _
  $region11: #{net_forward.1} parent=0 // pred_check_branch
    %13 = sbr.rel (0) target = $region13
  $region12: #{net_forward.1} parent=0 // pred_region
    _
  $region13: #{net_forward.1} parent=0 // pred_fallthru
    _
  %v14 = vld [vmem:[%s0] sm:$0xff]
  %v15 = vld [vmem:[%s1] sm:$0xff]
  %v16 = vld [vmem:[%s1 + $0x8] sm:$0xff]
  %v17 = vld [vmem:[%s1 + $0x10] sm:$0xff]
  %v18 = vld [vmem:[%s1 + $0x18] sm:$0xff]
  %v19 = vld [vmem:[%s2] sm:$0x1]
  %v21 = vlaneseq
  %v22 = vshrl.u32 %v21, 7
  %v23 = vsub.s32 0, %v22
  %v24 = vrot.slane %v19, %v23
  %vm26 = vcmask 261120
  %v28 = vsel %vm26, %v14, 0
  %30 = vmatprep.subr.mxu0 0.0
  %31 = vmatpush1.msra.mxu0 %v15
  %32 = vmatprep.subr.mxu0 0.0
  %33 = vmatpush1.msra.mxu0 %v16
  %34 = vmatprep.subr.mxu0 0.0
  %35 = vmatpush1.msra.mxu0 %v17
  %36 = vmatprep.subr.mxu0 0.0
  %37 = vmatpush1.msra.mxu0 %v18
  %38 = vmatprep.subr.mxu0 0.0
  %39 = vmatpush1.msra.mxu0 0.0
  %40 = vmatprep.subr.mxu0 0.0
  %41 = vmatpush1.msra.mxu0 0.0
  %42 = vmatprep.subr.mxu0 0.0
  %43 = vmatpush1.msra.mxu0 0.0
  %44 = vmatprep.subr.mxu0 0.0
  %45 = vmatpush1.msra.mxu0 0.0
  %46 = vmatprep.subr.mxu0 0.0
  %47 = vmatpush1.msra.mxu0 0.0
  %48 = vmatprep.subr.mxu0 0.0
  %49 = vmatpush1.msra.mxu0 0.0
  %50 = vmatprep.subr.mxu0 0.0
  %51 = vmatpush1.msra.mxu0 0.0
  %52 = vmatprep.subr.mxu0 0.0
  %53 = vmatpush1.msra.mxu0 0.0
  %54 = vmatprep.subr.mxu0 0.0
  %55 = vmatpush1.msra.mxu0 0.0
  %56 = vmatprep.subr.mxu0 0.0
  %57 = vmatpush1.msra.mxu0 0.0
  %58 = vmatprep.subr.mxu0 0.0
  %59 = vmatpush1.msra.mxu0 0.0
  %60 = vmatprep.subr.mxu0 0.0
  %61 = vmatpush1.msra.mxu0 0.0
  %62 = vmatprep.subr.mxu0 0.0
  %63 = vmatpush1.msra.mxu0 0.0
  %64 = vmatprep.subr.mxu0 0.0
  %65 = vmatpush1.msra.mxu0 0.0
  %66 = vmatprep.subr.mxu0 0.0
  %67 = vmatpush1.msra.mxu0 0.0
  %68 = vmatprep.subr.mxu0 0.0
  %69 = vmatpush1.msra.mxu0 0.0
  %70 = vmatprep.subr.mxu0 0.0
  %71 = vmatpush1.msra.mxu0 0.0
  %72 = vmatprep.subr.mxu0 0.0
  %73 = vmatpush1.msra.mxu0 0.0
  %74 = vmatprep.subr.mxu0 0.0
  %75 = vmatpush1.msra.mxu0 0.0
  %76 = vmatprep.subr.mxu0 0.0
  %77 = vmatpush1.msra.mxu0 0.0
  %78 = vmatprep.subr.mxu0 0.0
  %79 = vmatpush1.msra.mxu0 0.0
  %80 = vmatprep.subr.mxu0 0.0
  %81 = vmatpush1.msra.mxu0 0.0
  %82 = vmatprep.subr.mxu0 0.0
  %83 = vmatpush1.msra.mxu0 0.0
  %84 = vmatprep.subr.mxu0 0.0
  %85 = vmatpush1.msra.mxu0 0.0
  %86 = vmatprep.subr.mxu0 0.0
  %87 = vmatpush1.msra.mxu0 0.0
  %88 = vmatprep.subr.mxu0 0.0
  %89 = vmatpush1.msra.mxu0 0.0
  %90 = vmatprep.subr.mxu0 0.0
  %91 = vmatpush1.msra.mxu0 0.0
  %92 = vmatprep.subr.mxu0 0.0
  %93 = vmatpush1.msra.mxu0 0.0
  %94 = vmatprep.mubr.f32.mxu0 0.0
  %95 = vmatmul.mubr.f32.gmra.mrb[0].mxu0 %v28
  %v96 = vpop.f32.mrb[0].mxu0
  %v97 = vadd.f32 %v24, %v96
  %v98 = vpop.f32.mrb[0].mxu0
  %99 = vdwg.mxu0
  %100 = vst [vmem:[%s3] sm:$0xff] %v97
  // Predicated region
  $region14: #{net_forward.1} parent=0 // pred_check
    _
  $region15: #{net_forward.1} parent=0 // pred_check_branch
    %102 = sbr.rel (0) target = $region17
  $region16: #{net_forward.1} parent=0 // pred_region
    _
  $region17: #{net_forward.1} parent=0 // pred_fallthru
    _
  // Predicated region
  $region18: #{net_forward.1} parent=0 // pred_check
    _
  $region19: #{net_forward.1} parent=0 // pred_check_branch
    %104 = sbr.rel (0) target = $region21
  $region20: #{net_forward.1} parent=0 // pred_region
    _
  $region21: #{net_forward.1} parent=0 // pred_fallthru
    _

</llo_original>
